<compile_context>
chip_gen: v7x
topology: tpu7x:2x2x1
jax: 0.10.0
libtpu: 0.0.40
codegen_flags: <defaults>
</compile_context>

<pallas_src>
import jax
import jax.numpy as jnp
from jax.experimental import pallas as pl
from jax.experimental.pallas import tpu as pltpu


# Large finite negative: exp(_NEG_BIG - m) underflows to exactly 0.0 in f32
# (identical result to -inf masking for any valid n_wins >= 1) but avoids the
# NaN attention weights PyTorch would produce if a batch had n_wins == 0.
_NEG_BIG = -1e30


def _pool_att_ff_kernel(x_ref, slab_ref, nwins_ref, out_ref):
    B, T, D = x_ref.shape

    x = x_ref[...]                                   # (B, T, D) f32
    x2d = x.reshape(B * T, D)                        # leading-dim collapse (layout-preserving, T % 8 == 0)

    # Static views into the packed parameter slab (one DMA covers all weights).
    # Full 128-lane reads for the linear1/linear2 params: the zero padding
    # beyond H contributes exact zeros through matmul / ReLU / the w2 reduce,
    # and full-lane views avoid sub-lane-slice masked loads / relayout copies.
    w1t = slab_ref[0:D, :]                           # (D, 128) linear1 weight^T (zero-padded)
    b1 = slab_ref[D:D + 1, :]                        # (1, 128) linear1 bias     (zero-padded)
    w2 = slab_ref[D + 1:D + 2, :]                    # (1, 128) linear2 weight   (zero-padded)
    w3 = slab_ref[D + 2:D + 3, 0:D]                  # (1, D)   linear3 weight (lane width matches x)
    b3 = slab_ref[D + 2:D + 3, D:D + 1]              # (1, 1)   linear3 bias

    # ---- linear1 + ReLU (dropout == identity at inference) -- MXU ----------
    h = jnp.dot(x2d, w1t, preferred_element_type=jnp.float32) + b1   # (B*T, 128)
    h = jnp.maximum(h, 0.0).reshape(B, T, 128)        # leading-dim split (layout-preserving)

    # ---- linear2 -> one attention logit per window (b2 dropped: softmax is
    #      shift-invariant, so it is a mathematical no-op) --------------------
    # Kept as VPU multiply + XLU lane reduce: a (.,1) dot formulation would
    # force a minor-dim reshape / Mosaic relayout for zero benefit here.
    s = jnp.sum(h * w2[None, :, :], axis=-1)                         # (B, T)

    # ---- re-associated tail: y[b,t] = x[b,t,:] . w3 + b3 --------------------
    # (valid because the softmax weights sum to exactly 1; masked e are 0)
    y = jnp.sum(x * w3[None, :, :], axis=-1) + b3                    # (B, T)

    # ---- mask windows t >= n_wins[b]: single vectorized compare + select ----
    nw = nwins_ref[...]                                              # (B, 1) int32
    t_ids = jax.lax.broadcasted_iota(jnp.int32, (B, T), 1)
    s = jnp.where(t_ids < nw, s, _NEG_BIG)

    # ---- unnormalised softmax; fold 1/sum into one final divide -------------
    m = jnp.max(s, axis=1, keepdims=True)              # (B, 1)
    e = jnp.exp(s - m)                                  # (B, T)
    num = jnp.sum(e * y, axis=1, keepdims=True)         # (B, 1)  sum_t e*y
    den = jnp.sum(e, axis=1, keepdims=True)             # (B, 1)  sum_t e

    # ---- write (b3 already folded into y) ------------------------------------
    out_ref[...] = num / den                            # (B, 1)


def prepare_pool_att_ff_params(params):
    """One-time repacking of the module's weights (do NOT call per forward).

    Returns an (8,128)-aligned f32 slab of shape (ceil((D+3)/8)*8, 128):
      rows [0:D), cols [0:H) = w1^T ; row D = b1 ; row D+1 = w2 ;
      row D+2, cols [0:D) = w3, col D = b3.
    b2 is intentionally dropped (softmax shift invariance). Doing the
    transpose / reshape / padding here keeps those XLA ops off the per-call
    path, and a single slab means one weight DMA per call instead of six.
    """
    w1 = jnp.asarray(params["w1"], jnp.float32)       # (H, D)
    H, D = w1.shape
    assert H <= 128 and D <= 127, "slab packing assumes H<=128 and D+1<=128 lanes"
    rows = ((D + 3 + 7) // 8) * 8
    slab = jnp.zeros((rows, 128), jnp.float32)
    slab = slab.at[0:D, 0:H].set(w1.T)
    slab = slab.at[D, 0:H].set(jnp.asarray(params["b1"], jnp.float32).reshape(H))
    slab = slab.at[D + 1, 0:H].set(jnp.asarray(params["w2"], jnp.float32).reshape(H))
    slab = slab.at[D + 2, 0:D].set(jnp.asarray(params["w3"], jnp.float32).reshape(D))
    slab = slab.at[D + 2, D].set(jnp.asarray(params["b3"], jnp.float32).reshape(()))
    return slab


def pool_att_ff(x, n_wins, slab):
    """x: (B, T, D) f32; n_wins: (B,) int; slab from prepare_pool_att_ff_params."""
    B, T, D = x.shape
    # The in-kernel leading-dim reshapes are layout-preserving only when T is a
    # multiple of the f32 sublane tile (8); pad T upstream otherwise.
    assert T % 8 == 0, "pad T to a multiple of 8 before calling pool_att_ff"
    vmem = pl.BlockSpec(memory_space=pltpu.MemorySpace.VMEM)
    nwins2d = jnp.asarray(n_wins, jnp.int32).reshape(B, 1)
    # Single grid-less call; whole-array VMEM blocks (total live data is a few
    # tens of KiB, far below VMEM on v5e/v6e/v7x, and a grid would only add
    # per-step overhead at this shape).
    # TODO(synk): for a large fused batch, add a leading grid axis over B with
    # dimension_semantics=("parallel",) (2x on v7x's two TensorCores), size the
    # B-block against v7x's 32 MiB scoped VMEM, stream x in bf16, and emit a
    # lane-dense output instead of (B, 1).
    return pl.pallas_call(
        _pool_att_ff_kernel,
        out_shape=jax.ShapeDtypeStruct((B, 1), jnp.float32),
        in_specs=[vmem, vmem, vmem],
        out_specs=vmem,
    )(x, slab, nwins2d)


# TODO(synk): training-mode dropout (RNG mask via pltpu.prng_*) is not
# implemented; this kernel reproduces the inference path only.


def _ref_forward(x, n_wins, p):
    """Pure-JAX reference mirroring the PyTorch code."""
    h = jax.nn.relu(x @ p["w1"].T + p["b1"])                # (B, T, H)
    att = h @ p["w2"].T + p["b2"]                           # (B, T, 1)
    att = jnp.swapaxes(att, 1, 2)                           # (B, 1, T)
    mask = jnp.arange(x.shape[1])[None, :] < n_wins[:, None]
    att = jnp.where(mask[:, None, :], att, -jnp.inf)
    att = jax.nn.softmax(att, axis=2)
    pooled = jnp.einsum("bot,btd->bod", att, x)[:, 0]       # (B, D)
    return pooled @ p["w3"].T + p["b3"]                     # (B, 1)


if __name__ == "__main__":
    # args = {'td_sa_d_model': 32, 'pool_att_h': 24, 'pool_att_dropout': 0.1}
    B, T, D, H = 2, 16, 32, 24

    key = jax.random.PRNGKey(0)
    kx, k1, k2, k3, k4, k5, k6 = jax.random.split(key, 7)

    x = jax.random.normal(kx, (B, T, D), dtype=jnp.float32)
    n_wins = jnp.array([T, 9], dtype=jnp.int32)

    params = {
        "w1": jax.random.normal(k1, (H, D), dtype=jnp.float32) * (1.0 / D ** 0.5),
        "b1": jax.random.normal(k2, (H,), dtype=jnp.float32) * 0.1,
        "w2": jax.random.normal(k3, (1, H), dtype=jnp.float32) * (1.0 / H ** 0.5),
        "b2": jax.random.normal(k4, (1,), dtype=jnp.float32) * 0.1,
        "w3": jax.random.normal(k5, (1, D), dtype=jnp.float32) * (1.0 / D ** 0.5),
        "b3": jax.random.normal(k6, (1,), dtype=jnp.float32) * 0.1,
    }

    # One-time weight packing (kept off the per-call path).
    slab = prepare_pool_att_ff_params(params)

    out = jax.block_until_ready(pool_att_ff(x, n_wins, slab))
    ref = jax.block_until_ready(_ref_forward(x, n_wins, params))

    assert out.shape == (B, 1), out.shape
    assert jnp.allclose(out, ref, rtol=1e-5, atol=1e-5), (out, ref)
    print("KERNEL_OK")
</pallas_src>

<mosaic_0001>
module attributes {stable_mosaic.version = 11 : i64} {
  func.func @_pool_att_ff_kernel(%arg0: memref<2x16x32xf32, #tpu.memory_space<vmem>>, %arg1: memref<40x128xf32, #tpu.memory_space<vmem>>, %arg2: memref<2x1xi32, #tpu.memory_space<vmem>>, %arg3: memref<2x1xf32, #tpu.memory_space<vmem>>) attributes {dimension_semantics = [], scalar_prefetch = 0 : i64, scratch_operands = 0 : i64, tpu.core_type = #tpu.core_type<tc>} {
    %c0 = arith.constant 0 : index
    %c0_0 = arith.constant 0 : index
    %c0_1 = arith.constant 0 : index
    %0 = vector.load %arg0[%c0, %c0_0, %c0_1] : memref<2x16x32xf32, #tpu.memory_space<vmem>>, vector<2x16x32xf32>
    %1 = vector.shape_cast %0 : vector<2x16x32xf32> to vector<32x32xf32>
    %c0_2 = arith.constant 0 : index
    %c0_3 = arith.constant 0 : index
    %2 = vector.load %arg1[%c0_2, %c0_3] : memref<40x128xf32, #tpu.memory_space<vmem>>, vector<32x128xf32>
    %c32 = arith.constant 32 : index
    %c0_4 = arith.constant 0 : index
    %3 = vector.load %arg1[%c32, %c0_4] : memref<40x128xf32, #tpu.memory_space<vmem>>, vector<1x128xf32>
    %c33 = arith.constant 33 : index
    %c0_5 = arith.constant 0 : index
    %4 = vector.load %arg1[%c33, %c0_5] : memref<40x128xf32, #tpu.memory_space<vmem>>, vector<1x128xf32>
    %c34 = arith.constant 34 : index
    %c0_6 = arith.constant 0 : index
    %5 = vector.load %arg1[%c34, %c0_6] : memref<40x128xf32, #tpu.memory_space<vmem>>, vector<1x32xf32>
    %c34_7 = arith.constant 34 : index
    %c32_8 = arith.constant 32 : index
    %6 = vector.load %arg1[%c34_7, %c32_8] : memref<40x128xf32, #tpu.memory_space<vmem>>, vector<1x1xf32>
    %cst = arith.constant dense<0.000000e+00> : vector<32x128xf32>
    %7 = tpu.matmul %1, %2, %cst {dimension_numbers = #tpu.dot_dimension_numbers<[1], [0], [0], [1], [0, 0, 1, 1], [], []>} : vector<32x32xf32>, vector<32x128xf32>, vector<32x128xf32> -> vector<32x128xf32>
    %8 = vector.broadcast %3 : vector<1x128xf32> to vector<32x128xf32>
    %9 = arith.addf %7, %8 : vector<32x128xf32>
    %cst_9 = arith.constant 0.000000e+00 : f32
    %10 = vector.broadcast %cst_9 : f32 to vector<32x128xf32>
    %11 = arith.maximumf %9, %10 : vector<32x128xf32>
    %12 = vector.shape_cast %11 : vector<32x128xf32> to vector<2x16x128xf32>
    %13 = vector.shape_cast %4 : vector<1x128xf32> to vector<1x1x128xf32>
    %14 = vector.broadcast %13 : vector<1x1x128xf32> to vector<2x16x128xf32>
    %15 = arith.mulf %12, %14 : vector<2x16x128xf32>
    %cst_10 = arith.constant dense<0.000000e+00> : vector<2x16xf32>
    %16 = vector.multi_reduction <add>, %15, %cst_10 [2] : vector<2x16x128xf32> to vector<2x16xf32>
    %17 = vector.shape_cast %5 : vector<1x32xf32> to vector<1x1x32xf32>
    %18 = vector.broadcast %17 : vector<1x1x32xf32> to vector<2x16x32xf32>
    %19 = arith.mulf %0, %18 : vector<2x16x32xf32>
    %cst_11 = arith.constant dense<0.000000e+00> : vector<2x16xf32>
    %20 = vector.multi_reduction <add>, %19, %cst_11 [2] : vector<2x16x32xf32> to vector<2x16xf32>
    %21 = vector.broadcast %6 : vector<1x1xf32> to vector<2x16xf32>
    %22 = arith.addf %20, %21 : vector<2x16xf32>
    %c0_12 = arith.constant 0 : index
    %c0_13 = arith.constant 0 : index
    %23 = vector.load %arg2[%c0_12, %c0_13] : memref<2x1xi32, #tpu.memory_space<vmem>>, vector<2x1xi32>
    %24 = tpu.iota {dimensions = array<i32: 1>} : vector<2x16xi32>
    %25 = vector.broadcast %23 : vector<2x1xi32> to vector<2x16xi32>
    %26 = arith.cmpi slt, %24, %25 : vector<2x16xi32>
    %cst_14 = arith.constant -1.000000e+30 : f32
    %27 = vector.broadcast %cst_14 : f32 to vector<2x16xf32>
    %28 = arith.select %26, %16, %27 : vector<2x16xi1>, vector<2x16xf32>
    %cst_15 = arith.constant dense<0xFF800000> : vector<2xf32>
    %29 = vector.multi_reduction <maximumf>, %28, %cst_15 [1] : vector<2x16xf32> to vector<2xf32>
    %30 = vector.shape_cast %29 : vector<2xf32> to vector<2x1xf32>
    %31 = vector.broadcast %30 : vector<2x1xf32> to vector<2x16xf32>
    %32 = arith.subf %28, %31 : vector<2x16xf32>
    %33 = math.exp %32 : vector<2x16xf32>
    %34 = arith.mulf %33, %22 : vector<2x16xf32>
    %cst_16 = arith.constant dense<0.000000e+00> : vector<2xf32>
    %35 = vector.multi_reduction <add>, %34, %cst_16 [1] : vector<2x16xf32> to vector<2xf32>
    %36 = vector.shape_cast %35 : vector<2xf32> to vector<2x1xf32>
    %cst_17 = arith.constant dense<0.000000e+00> : vector<2xf32>
    %37 = vector.multi_reduction <add>, %33, %cst_17 [1] : vector<2x16xf32> to vector<2xf32>
    %38 = vector.shape_cast %37 : vector<2xf32> to vector<2x1xf32>
    %39 = arith.divf %36, %38 : vector<2x1xf32>
    %c0_18 = arith.constant 0 : index
    %c0_19 = arith.constant 0 : index
    %40 = vector.load %arg3[%c0_18, %c0_19] : memref<2x1xf32, #tpu.memory_space<vmem>>, vector<2x1xf32>
    tpu.vector_store %arg3[%c0_18, %c0_19], %39 {strides = array<i32>} : memref<2x1xf32, #tpu.memory_space<vmem>>, vector<2x1xf32>,
    return
  }
}

</mosaic_0001>

<llo_original>
// kernel: tpu_custom_call.1
$region0: #{tpu_custom_call.1}
  #allocation0 [shape = 'u32[]', space=smem, size = 0x4, offset = 0x4, fixed_abs, tag = 'smem constant byte address 0x4 - core index']
  #allocation1 [shape = 'u32[144,128]{1,0:T(1,128)}', space=vmem, size = 0x12000, scoped, tag = 'internal scratch']
  %s0 = inlined_call_operand.hbm [shape: f32[2,16,32], index: 0, kind: input, shape index: {}]
  %s1 = inlined_call_operand.hbm [shape: f32[40,128], index: 1, kind: input, shape index: {}]
  %s2 = inlined_call_operand.vmem [shape: s32[2,1], index: 2, kind: input, shape index: {}]
  %s3 = inlined_call_operand.vmem [shape: f32[2,1], index: 3, kind: output, shape index: {}]
  %s4 = sld [smem:[#allocation0]]
  $region30: #{tpu_custom_call.1} parent=0
    _
  %s6 = ssub.s32 1, %s4
  %s7 = scalar_select 0, %s6, %s4
  $region1: #{tpu_custom_call.1} parent=0
    #allocation2 [shape = 'u8[16384]{0}', space=vmem, size = 0x4000, scoped, tag = 'input window, operand 0, single buffered']
    #allocation3 [shape = 's32[1]{0}', space=sflag, size = 0x4, scoped, tag = 'scoped memory for tpu_custom_call.1']
    #allocation4 [shape = 'u8[20480]{0}', space=vmem, size = 0x5000, scoped, tag = 'input window, operand 1, single buffered']
    #allocation5 [shape = 's32[1]{0}', space=sflag, size = 0x4, scoped, tag = 'scoped memory for tpu_custom_call.1']
    %8 = vsyncpa [#allocation3], 0
    %9 = vsyncpa [#allocation5], 0
    // Predicated region
    $region2: #{tpu_custom_call.1} parent=1 // pred_check
      _
    $region3: #{tpu_custom_call.1} parent=1 // pred_check_branch
      %11 = sbr.rel (0) target = $region5
    $region4: #{tpu_custom_call.1} parent=1 // pred_region
      %s13 = ssub.s32 512, 512
      %14 = vsyncadd [#allocation3], %s13
      %s15 = sshll.u32 [#allocation2], 4
      %s16 = int_to_ptr.vmem [resolvable:$true] %s15
      %21 = dma.hbm_to_vmem [thread:$0]  %s0, 512, %s16, [#allocation3], 128, 128, 8
    $region5: #{tpu_custom_call.1} parent=1 // pred_fallthru
      _
    // Predicated region
    $region6: #{tpu_custom_call.1} parent=1 // pred_check
      _
    $region7: #{tpu_custom_call.1} parent=1 // pred_check_branch
      %23 = sbr.rel (0) target = $region9
    $region8: #{tpu_custom_call.1} parent=1 // pred_region
      %s25 = ssub.s32 640, 640
      %26 = vsyncadd [#allocation5], %s25
      %s27 = sshll.u32 [#allocation4], 4
      %s28 = int_to_ptr.vmem [resolvable:$true] %s27
      %33 = dma.hbm_to_vmem [thread:$0]  %s1, 640, %s28, [#allocation5], 128, 128, 8
    $region9: #{tpu_custom_call.1} parent=1 // pred_fallthru
      _
    // Predicated region
    $region10: #{tpu_custom_call.1} parent=1 // pred_check
      _
    $region11: #{tpu_custom_call.1} parent=1 // pred_check_branch
      %35 = sbr.rel (0) target = $region13
    $region12: #{tpu_custom_call.1} parent=1 // pred_region
      _
    $region13: #{tpu_custom_call.1} parent=1 // pred_fallthru
      _
    // Predicated region
    $region14: #{tpu_custom_call.1} parent=1 // pred_check
      _
    $region15: #{tpu_custom_call.1} parent=1 // pred_check_branch
      %37 = sbr.rel (0) target = $region17
    $region16: #{tpu_custom_call.1} parent=1 // pred_region
      %38 = dma.done [#allocation3], 512
    $region17: #{tpu_custom_call.1} parent=1 // pred_fallthru
      _
    // Predicated region
    $region18: #{tpu_custom_call.1} parent=1 // pred_check
      _
    $region19: #{tpu_custom_call.1} parent=1 // pred_check_branch
      %40 = sbr.rel (0) target = $region21
    $region20: #{tpu_custom_call.1} parent=1 // pred_region
      %41 = dma.done [#allocation5], 640
    $region21: #{tpu_custom_call.1} parent=1 // pred_fallthru
      _
    %v42 = vld [vmem:[#allocation2] sm:$0xff]
    %v43 = vld [vmem:[#allocation2 + $0x8] sm:$0xff]
    %v44 = vld [vmem:[#allocation2 + $0x10] sm:$0xff]
    %v45 = vld [vmem:[#allocation2 + $0x18] sm:$0xff]
    %v46 = vld [vmem:[#allocation4] sm:$0xff]
    %v47 = vld [vmem:[#allocation4 + $0x8] sm:$0xff]
    %v48 = vld [vmem:[#allocation4 + $0x10] sm:$0xff]
    %v49 = vld [vmem:[#allocation4 + $0x18] sm:$0xff]
    %v50 = vld [vmem:[#allocation4 + $0x20] sm:$0x1]
    %v51 = vld [vmem:[#allocation4 + $0x21] sm:$0x1]
    %v52 = vld [vmem:[#allocation4 + $0x22] sm:$0x1]
    %v53 = vlaneseq
    %v54 = vshrl.u32 %v53, 7
    %v55 = vsub.s32 0, %v54
    %v56 = vrot.slane %v50, %v55
    %vm57 = vcmask 261120
    %v59 = vsel %vm57, %v42, 0
    %v62 = vsel %vm57, %v43, 0
    %v65 = vsel %vm57, %v44, 0
    %v68 = vsel %vm57, %v45, 0
    %70 = vmatprep.subr.mxu0 0.0
    %71 = vmatpush1.msra.mxu0 %v46
    %72 = vmatprep.subr.mxu0 0.0
    %73 = vmatpush1.msra.mxu0 %v47
    %74 = vmatprep.subr.mxu0 0.0
    %75 = vmatpush1.msra.mxu0 %v48
    %76 = vmatprep.subr.mxu0 0.0
    %77 = vmatpush1.msra.mxu0 %v49
    %78 = vmatprep.subr.mxu0 0.0
    %79 = vmatpush1.msra.mxu0 0.0
    %80 = vmatprep.subr.mxu0 0.0
    %81 = vmatpush1.msra.mxu0 0.0
    %82 = vmatprep.subr.mxu0 0.0
    %83 = vmatpush1.msra.mxu0 0.0
    %84 = vmatprep.subr.mxu0 0.0
    %85 = vmatpush1.msra.mxu0 0.0
    %86 = vmatprep.subr.mxu0 0.0
    %87 = vmatpush1.msra.mxu0 0.0
    %88 = vmatprep.subr.mxu0 0.0
    %89 = vmatpush1.msra.mxu0 0.0
    %90 = vmatprep.subr.mxu0 0.0
    %91 = vmatpush1.msra.mxu0 0.0
    %92 = vmatprep.subr.mxu0 0.0
    %93 = vmatpush1.msra.mxu0 0.0
    %94 = vmatprep.subr.mxu0 0.0
    %95 = vmatpush1.msra.mxu0 0.0
    %96 = vmatprep.subr.mxu0 0.0
    %97 = vmatpush1.msra.mxu0 0.0
    %98 = vmatprep.subr.mxu0 0.0
    %99 = vmatpush1.msra.mxu0 0.0
    %100 = vmatprep.subr.mxu0 0.0
    %101 = vmatpush1.msra.mxu0 0.0
    %102 = vmatprep.subr.mxu0 0.0
    %103 = vmatpush1.msra.mxu0 0.0
    %104 = vmatprep.subr.mxu0 0.0
    %105 = vmatpush1.msra.mxu0 0.0
    %106 = vmatprep.subr.mxu0 0.0
    %107 = vmatpush1.msra.mxu0 0.0
    %108 = vmatprep.subr.mxu0 0.0
    %109 = vmatpush1.msra.mxu0 0.0
    %110 = vmatprep.subr.mxu0 0.0
    %111 = vmatpush1.msra.mxu0 0.0
    %112 = vmatprep.subr.mxu0 0.0
    %113 = vmatpush1.msra.mxu0 0.0
    %114 = vmatprep.subr.mxu0 0.0
    %115 = vmatpush1.msra.mxu0 0.0
    %116 = vmatprep.subr.mxu0 0.0
    %117 = vmatpush1.msra.mxu0 0.0
    %118 = vmatprep.subr.mxu0 0.0
    %119 = vmatpush1.msra.mxu0 0.0
    %120 = vmatprep.subr.mxu0 0.0
    %121 = vmatpush1.msra.mxu0 0.0
    %122 = vmatprep.subr.mxu0 0.0
    %123 = vmatpush1.msra.mxu0 0.0
    %124 = vmatprep.subr.mxu0 0.0
    %125 = vmatpush1.msra.mxu0 0.0
    %126 = vmatprep.subr.mxu0 0.0
    %127 = vmatpush1.msra.mxu0 0.0
    %128 = vmatprep.subr.mxu0 0.0
    %129 = vmatpush1.msra.mxu0 0.0
    %130 = vmatprep.subr.mxu0 0.0
    %131 = vmatpush1.msra.mxu0 0.0
    %132 = vmatprep.subr.mxu0 0.0
    %133 = vmatpush1.msra.mxu0 0.0
    %134 = vmatprep.mubr.f32.mxu0 0.0
    %135 = vmatmul.mubr.f32.gmra.mrb[0].mxu0 %v59
    %v136 = vpop.f32.mrb[0].mxu0
    %v137 = vadd.f32 %v56, %v136
    %v138 = vpop.f32.mrb[0].mxu0
    %139 = vmatprep.mubr.f32.mxu0 0.0
    %140 = vmatmul.mubr.f32.gmra.mrb[0].mxu0 %v62
    %v141 = vpop.f32.mrb[0].mxu0
    %v142 = vadd.f32 %v56, %v141
    %v143 = vpop.f32.mrb[0].mxu0
    %144 = vmatprep.mubr.f32.mxu0 0.0
    %145 = vmatmul.mubr.f32.gmra.mrb[0].mxu0 %v65
    %v146 = vpop.f32.mrb[0].mxu0
    %v147 = vadd.f32 %v56, %v146
    %v148 = vpop.f32.mrb[0].mxu0
    %149 = vmatprep.mubr.f32.mxu0 0.0
    %150 = vmatmul.mubr.f32.gmra.mrb[0].mxu0 %v68
    %v151 = vpop.f32.mrb[0].mxu0
    %v152 = vadd.f32 %v56, %v151
    %v153 = vpop.f32.mrb[0].mxu0
    %154 = vdwg.mxu0
    %v155 = vmax.f32 %v137, 0.0
    %v156 = vmax.f32 %v142, 0.0
    %v157 = vmax.f32 %v147, 0.0
    %v158 = vmax.f32 %v152, 0.0
    %v159 = vlaneseq
    %v160 = vshrl.u32 %v159, 7
    %v161 = vsub.s32 0, %v160
    %v162 = vrot.slane %v51, %v161
    %v163 = vmul.f32 %v155, %v162
    %v164 = vmul.f32 %v156, %v162
    %v165 = vmul.f32 %v157, %v162
    %v166 = vmul.f32 %v158, %v162
    %167 = vadd.xlane.f32.xlu0 %v163
    %v168 = vpop.xlane.xlu0 %167
    %169 = vadd.xlane.f32.xlu0 %v164
    %v170 = vpop.xlane.xlu0 %169
    %171 = vadd.xlane.f32.xlu0 %v165
    %v172 = vpop.xlane.xlu0 %171
    %173 = vadd.xlane.f32.xlu0 %v166
    %v174 = vpop.xlane.xlu0 %173
    %v175 = vlaneseq
    %v176 = vshrl.u32 %v175, 7
    %v177 = vsub.s32 0, %v176
    %v178 = vrot.slane %v52, %v177
    %v179 = vmul.f32 %v42, %v178
    %v180 = vmul.f32 %v43, %v178
    %v181 = vmul.f32 %v44, %v178
    %v182 = vmul.f32 %v45, %v178
    %v183 = vsel %vm57, %v179, 0.0
    %184 = vadd.xlane.f32.xlu0 %v183
    %v185 = vpop.xlane.xlu0 %184
    %v186 = vsel %vm57, %v180, 0.0
    %187 = vadd.xlane.f32.xlu0 %v186
    %v188 = vpop.xlane.xlu0 %187
    %v189 = vsel %vm57, %v181, 0.0
    %190 = vadd.xlane.f32.xlu0 %v189
    %v191 = vpop.xlane.xlu0 %190
    %v192 = vsel %vm57, %v182, 0.0
    %193 = vadd.xlane.f32.xlu0 %v192
    %v194 = vpop.xlane.xlu0 %193
    %196 = vrot.lane.b32.xlu0 %v52, 96
    %v197 = vpop.permute.xlu0 %196
    %s198 = vtos %v197
    %v199 = vstv %s198
    %v201 = vadd.f32 %v185, %v199
    %v202 = vadd.f32 %v188, %v199
    %v203 = vadd.f32 %v191, %v199
    %v204 = vadd.f32 %v194, %v199
    %v205 = vld [vmem:[%s2] sm:$0x3]
    %v206 = vlaneseq
    %v207 = vand.u32 %v206, 127
    %208 = vset.pattern.permute.xlu0 0
    %209 = vperm.xlu0 %208, %v205
    %v210 = vpop.permute.xlu0 %209
    %vm211 = vcmp.lt.s32.totalorder %v207, %v210
    %v216 = vlaneseq
    %v217 = vshrl.u32 %v216, 7
    %v218 = vsub.s32 %v207, %v217
    %v219 = vrot.slane %v168, %v218
    %v220 = vadd.s32 %v207, 4294967288
    %v221 = vlaneseq
    %v222 = vshrl.u32 %v221, 7
    %v223 = vsub.s32 %v220, %v222
    %v224 = vrot.slane %v170, %v223
    %vm225 = vcmask 130112
    %v226 = vsel %vm225, %v224, %v219
    %v227 = vlaneseq
    %v228 = vshrl.u32 %v227, 7
    %v229 = vsub.s32 %v207, %v228
    %v230 = vrot.slane %v172, %v229
    %v231 = vlaneseq
    %v232 = vshrl.u32 %v231, 7
    %v233 = vsub.s32 %v220, %v232
    %v234 = vrot.slane %v174, %v233
    %v235 = vsel %vm225, %v234, %v230
    %vm236 = vcmask 1041409
    %v237 = vsel %vm236, %v235, %v226
    %v239 = vsel %vm211, %v237, -1e+30
    %vm240 = vcmask 123904
    %v241 = vsel %vm240, %v239, -inf
    %242 = vmax.xlane.f32.xlu0 %v241
    %v243 = vpop.xlane.xlu0 %242
    %v244 = vsub.f32 %v239, %v243
    %v245 = vmul.f32 %v244, 1.442695
    %v246 = vpow.pop %v245
    %v251 = vlaneseq
    %v252 = vshrl.u32 %v251, 7
    %v253 = vsub.s32 %v207, %v252
    %v254 = vrot.slane %v201, %v253
    %v255 = vlaneseq
    %v256 = vshrl.u32 %v255, 7
    %v257 = vsub.s32 %v220, %v256
    %v258 = vrot.slane %v202, %v257
    %v259 = vsel %vm225, %v258, %v254
    %v260 = vlaneseq
    %v261 = vshrl.u32 %v260, 7
    %v262 = vsub.s32 %v207, %v261
    %v263 = vrot.slane %v203, %v262
    %v264 = vlaneseq
    %v265 = vshrl.u32 %v264, 7
    %v266 = vsub.s32 %v220, %v265
    %v267 = vrot.slane %v204, %v266
    %v268 = vsel %vm225, %v267, %v263
    %v269 = vsel %vm236, %v268, %v259
    %v271 = vmul.f32 %v246, %v269
    %v272 = vsel %vm240, %v271, 0.0
    %273 = vadd.xlane.f32.xlu0 %v272
    %v274 = vpop.xlane.xlu0 %273
    %v275 = vsel %vm240, %v246, 0.0
    %276 = vadd.xlane.f32.xlu0 %v275
    %v277 = vpop.xlane.xlu0 %276
    %v278 = vrcp.pop %v277
    %v279 = vmul.f32 %v274, %v278
    %vm280 = vcmask 1024
    %281 = vst.msk [vmem:[%s3] sm:$0x3] %vm280, %v279
    // Predicated region
    $region22: #{tpu_custom_call.1} parent=1 // pred_check
      _
    $region23: #{tpu_custom_call.1} parent=1 // pred_check_branch
      %283 = sbr.rel (0) target = $region25
    $region24: #{tpu_custom_call.1} parent=1 // pred_region
      _
    $region25: #{tpu_custom_call.1} parent=1 // pred_fallthru
      _
    // Predicated region
    $region26: #{tpu_custom_call.1} parent=1 // pred_check
      _
    $region27: #{tpu_custom_call.1} parent=1 // pred_check_branch
      %285 = sbr.rel (0) target = $region29
    $region28: #{tpu_custom_call.1} parent=1 // pred_region
      _
    $region29: #{tpu_custom_call.1} parent=1 // pred_fallthru
      _
    %286 = vsyncpa [#allocation3], 1
    %287 = vsyncpa [#allocation5], 1

</llo_original>
